<compile_context>
chip_gen: v7x
topology: tpu7x:2x2x1
jax: 0.10.0
libtpu: 0.0.40
codegen_flags: <defaults>
</compile_context>

<pallas_src>
import functools

import jax
import jax.numpy as jnp
from jax import lax
from jax.experimental import pallas as pl
from jax.experimental.pallas import tpu as pltpu


def _pick_channel_block(C):
    """Channels per grid step.

    Keep the x block's second-minor dim either a multiple of 8 or the full channel
    dim so the (8,128) tiling rule is always satisfied; larger blocks amortize the
    ~0.35us per-step overhead.
    """
    for cand in (32, 16, 8):
        if C % cand == 0:
            return cand
    return C  # small / odd C: take all channels in one step


def _make_fused_kernel(cb):
    def kernel(x_ref, wd_ref, bd_ref, wp_ref, bp_ref, y_ref, acc_ref):
        # x_ref : (N, cb, Q)  bf16     input channel block
        # wd_ref: (cb, Q, P)  bf16     depthwise weight (pre-transposed)
        # bd_ref: (cb, 1, P)  f32      depthwise bias
        # wp_ref: (cb, O, 1)  f32      pointwise weight column for these channels
        # bp_ref: (1, O, 1)   f32      pointwise bias
        # y_ref : (N, O, P)   f32      output (resident across the reduction axis)
        # acc_ref:(N, O, P)   f32      VMEM accumulator scratch
        g = pl.program_id(0)

        @pl.when(g == 0)
        def _init():
            # Start the accumulator at the pointwise bias, broadcast over N and P.
            acc_ref[...] = jnp.broadcast_to(bp_ref[...], acc_ref.shape)

        # Static unroll over the channels of this block.
        for c in range(cb):
            # Depthwise "linear conv" for channel c: (N,Q) @ (Q,P) on the MXU,
            # bf16 inputs with f32 accumulation.
            z = lax.dot_general(
                x_ref[:, c, :], wd_ref[c],
                (((1,), (0,)), ((), ())),
                preferred_element_type=jnp.float32)          # (N, P) f32
            z = z + bd_ref[c]                                # + depthwise bias (1, P)
            # Pointwise 1x1 conv contribution of channel c (VPU broadcast-MAC):
            #   acc[n, o, p] += wp[o, c] * z[n, p]
            acc_ref[...] += z[:, None, :] * wp_ref[c][None, :, :]

        @pl.when(g == pl.num_programs(0) - 1)
        def _finalize():
            y_ref[...] = acc_ref[...].astype(y_ref.dtype)

    return kernel


@functools.partial(jax.jit, static_argnames=("output_img_size",))
def linear_conv2d(x_nchw, wd, bd, wp, bp, *, output_img_size):
    """x_nchw: (N, C, IH, IW); wd: (C, P, Q); bd: (C, P); wp: (O, C); bp: (O,)."""
    N, C, IH, IW = x_nchw.shape
    OH, OW = output_img_size
    Q, P = IH * IW, OH * OW
    O = wp.shape[0]

    cb = _pick_channel_block(C)
    grid = (C // cb,)

    # One-time XLA-side layout plumbing (weights are static in a real model):
    x_ncq = x_nchw.reshape(N, C, Q).astype(jnp.bfloat16)          # (N, C, Q) bf16
    wd_t = jnp.transpose(wd, (0, 2, 1)).astype(jnp.bfloat16)      # (C, Q, P) bf16
    bd3 = bd.reshape(C, 1, P).astype(jnp.float32)                 # (C, 1, P)
    wp3 = jnp.transpose(wp).reshape(C, O, 1).astype(jnp.float32)  # (C, O, 1)
    bp3 = bp.reshape(1, O, 1).astype(jnp.float32)                 # (1, O, 1)

    flops = 2 * C * N * P * Q + 2 * O * C * N * P
    bytes_accessed = (N * C * Q * 2 + C * Q * P * 2 + C * P * 4
                      + C * O * 4 + O * 4 + N * O * P * 4)

    y = pl.pallas_call(
        _make_fused_kernel(cb),
        out_shape=jax.ShapeDtypeStruct((N, O, P), jnp.float32),
        grid_spec=pltpu.PrefetchScalarGridSpec(
            num_scalar_prefetch=0,
            grid=grid,
            in_specs=[
                pl.BlockSpec((N, cb, Q), lambda g: (0, g, 0)),   # x channel block
                pl.BlockSpec((cb, Q, P), lambda g: (g, 0, 0)),   # depthwise weights
                pl.BlockSpec((cb, 1, P), lambda g: (g, 0, 0)),   # depthwise bias
                pl.BlockSpec((cb, O, 1), lambda g: (g, 0, 0)),   # pointwise weight cols
                pl.BlockSpec((1, O, 1), lambda g: (0, 0, 0)),    # pointwise bias
            ],
            out_specs=pl.BlockSpec((N, O, P), lambda g: (0, 0, 0)),
            scratch_shapes=[pltpu.VMEM((N, O, P), jnp.float32)],
        ),
        compiler_params=pltpu.CompilerParams(
            dimension_semantics=("arbitrary",)),                 # channel reduction axis
        cost_estimate=pl.CostEstimate(
            flops=flops, transcendentals=0, bytes_accessed=bytes_accessed),
    )(x_ncq, wd_t, bd3, wp3, bp3)

    # (N, O, P) -> PyTorch NCHW. Pure reshape, no transpose / extra HBM traffic.
    return y.reshape(N, O, OH, OW)


if __name__ == "__main__":
    # Small shapes consistent with the module.
    N, C_in, C_out = 2, 4, 8
    IH = IW = 16
    OH = OW = 8
    Q, P = IH * IW, OH * OW

    key = jax.random.PRNGKey(0)
    kx, kwd, kbd, kwp, kbp = jax.random.split(key, 5)

    x = jax.random.normal(kx, (N, C_in, IH, IW), jnp.float32)
    # Depthwise weight (C*OH*OW, 1, IH, IW) regrouped to (C, P, Q); biases likewise.
    wd = 0.05 * jax.random.normal(kwd, (C_in, P, Q), jnp.float32)
    bd = 0.05 * jax.random.normal(kbd, (C_in, P), jnp.float32)
    wp = 0.10 * jax.random.normal(kwp, (C_out, C_in), jnp.float32)
    bp = 0.10 * jax.random.normal(kbp, (C_out,), jnp.float32)

    y = linear_conv2d(x, wd, bd, wp, bp, output_img_size=(OH, OW))
    y = jax.block_until_ready(y)

    # Pure-JAX f32 reference (same semantics as the PyTorch forward).
    xc = x.reshape(N, C_in, Q)
    z_ref = jnp.einsum("ncq,cpq->ncp", xc, wd) + bd[None]
    y_ref = jnp.einsum("oc,ncp->nop", wp, z_ref) + bp[None, :, None]
    y_ref = y_ref.reshape(N, C_out, OH, OW)

    assert y.shape == (N, C_out, OH, OW)
    # bf16 MXU inputs with f32 accumulation -> bf16-level tolerance vs f32 reference.
    assert jnp.allclose(y, y_ref, atol=2e-2, rtol=2e-2), float(jnp.max(jnp.abs(y - y_ref)))
    print("KERNEL_OK")
</pallas_src>

<mosaic_0001>
module attributes {stable_mosaic.version = 11 : i64} {
  func.func @kernel(%arg0: i32, %arg1: memref<2x4x256xbf16, #tpu.memory_space<vmem>>, %arg2: memref<4x256x64xbf16, #tpu.memory_space<vmem>>, %arg3: memref<4x1x64xf32, #tpu.memory_space<vmem>>, %arg4: memref<4x8x1xf32, #tpu.memory_space<vmem>>, %arg5: memref<1x8x1xf32, #tpu.memory_space<vmem>>, %arg6: memref<2x8x64xf32, #tpu.memory_space<vmem>>, %arg7: memref<2x8x64xf32, #tpu.memory_space<vmem>>) attributes {dimension_semantics = [#tpu.dimension_semantics<arbitrary>], iteration_bounds = array<i64: 1>, scalar_prefetch = 0 : i64, scratch_operands = 1 : i64, tpu.core_type = #tpu.core_type<tc>, window_params = [{transform_indices = @transform_0, window_bounds = array<i64: 2, 4, 256>}, {transform_indices = @transform_1, window_bounds = array<i64: 4, 256, 64>}, {transform_indices = @transform_2, window_bounds = array<i64: 4, 1, 64>}, {transform_indices = @transform_3, window_bounds = array<i64: 4, 8, 1>}, {pipeline_mode = #tpu.pipeline_mode<synchronous>, transform_indices = @transform_4, window_bounds = array<i64: 1, 8, 1>}, {pipeline_mode = #tpu.pipeline_mode<synchronous>, transform_indices = @transform_5, window_bounds = array<i64: 2, 8, 64>}]} {
    %c0_i32 = arith.constant 0 : i32
    %0 = arith.cmpi eq, %arg0, %c0_i32 : i32
    %1 = arith.extui %0 : i1 to i32
    %c0_i32_0 = arith.constant 0 : i32
    %2 = arith.cmpi ne, %1, %c0_i32_0 : i32
    scf.if %2 {
      %c0_74 = arith.constant 0 : index
      %c0_75 = arith.constant 0 : index
      %c0_76 = arith.constant 0 : index
      %82 = vector.load %arg5[%c0_74, %c0_75, %c0_76] : memref<1x8x1xf32, #tpu.memory_space<vmem>>, vector<1x8x1xf32>
      %83 = vector.shape_cast %82 : vector<1x8x1xf32> to vector<1x8x1xf32>
      %84 = vector.broadcast %83 : vector<1x8x1xf32> to vector<2x8x64xf32>
      %c0_77 = arith.constant 0 : index
      %c0_78 = arith.constant 0 : index
      %c0_79 = arith.constant 0 : index
      %85 = vector.load %arg7[%c0_77, %c0_78, %c0_79] : memref<2x8x64xf32, #tpu.memory_space<vmem>>, vector<2x8x64xf32>
      tpu.vector_store %arg7[%c0_77, %c0_78, %c0_79], %84 {strides = array<i32>} : memref<2x8x64xf32, #tpu.memory_space<vmem>>, vector<2x8x64xf32>,
    } else {
    }
    %c0 = arith.constant 0 : index
    %c0_1 = arith.constant 0 : index
    %c0_2 = arith.constant 0 : index
    %3 = vector.load %arg1[%c0, %c0_1, %c0_2] : memref<2x4x256xbf16, #tpu.memory_space<vmem>>, vector<2x1x256xbf16>
    %4 = vector.shape_cast %3 : vector<2x1x256xbf16> to vector<2x256xbf16>
    %c0_3 = arith.constant 0 : index
    %c0_4 = arith.constant 0 : index
    %c0_5 = arith.constant 0 : index
    %5 = vector.load %arg2[%c0_3, %c0_4, %c0_5] : memref<4x256x64xbf16, #tpu.memory_space<vmem>>, vector<1x256x64xbf16>
    %6 = vector.shape_cast %5 : vector<1x256x64xbf16> to vector<256x64xbf16>
    %cst = arith.constant dense<0.000000e+00> : vector<2x64xf32>
    %7 = tpu.matmul %4, %6, %cst {dimension_numbers = #tpu.dot_dimension_numbers<[1], [0], [0], [1], [0, 0, 1, 1], [], []>} : vector<2x256xbf16>, vector<256x64xbf16>, vector<2x64xf32> -> vector<2x64xf32>
    %c0_6 = arith.constant 0 : index
    %c0_7 = arith.constant 0 : index
    %c0_8 = arith.constant 0 : index
    %8 = vector.load %arg3[%c0_6, %c0_7, %c0_8] : memref<4x1x64xf32, #tpu.memory_space<vmem>>, vector<1x1x64xf32>
    %9 = vector.shape_cast %8 : vector<1x1x64xf32> to vector<1x64xf32>
    %10 = vector.broadcast %9 : vector<1x64xf32> to vector<2x64xf32>
    %11 = arith.addf %7, %10 : vector<2x64xf32>
    %c0_9 = arith.constant 0 : index
    %c0_10 = arith.constant 0 : index
    %c0_11 = arith.constant 0 : index
    %12 = vector.load %arg7[%c0_9, %c0_10, %c0_11] : memref<2x8x64xf32, #tpu.memory_space<vmem>>, vector<2x8x64xf32>
    %13 = vector.shape_cast %11 : vector<2x64xf32> to vector<2x1x64xf32>
    %c0_12 = arith.constant 0 : index
    %c0_13 = arith.constant 0 : index
    %c0_14 = arith.constant 0 : index
    %14 = vector.load %arg4[%c0_12, %c0_13, %c0_14] : memref<4x8x1xf32, #tpu.memory_space<vmem>>, vector<1x8x1xf32>
    %15 = vector.shape_cast %14 : vector<1x8x1xf32> to vector<8x1xf32>
    %16 = vector.shape_cast %15 : vector<8x1xf32> to vector<1x8x1xf32>
    %17 = vector.broadcast %13 : vector<2x1x64xf32> to vector<2x8x64xf32>
    %18 = vector.broadcast %16 : vector<1x8x1xf32> to vector<2x8x64xf32>
    %19 = arith.mulf %17, %18 : vector<2x8x64xf32>
    %20 = arith.addf %12, %19 : vector<2x8x64xf32>
    %c0_15 = arith.constant 0 : index
    %c0_16 = arith.constant 0 : index
    %c0_17 = arith.constant 0 : index
    %21 = vector.load %arg7[%c0_15, %c0_16, %c0_17] : memref<2x8x64xf32, #tpu.memory_space<vmem>>, vector<2x8x64xf32>
    tpu.vector_store %arg7[%c0_15, %c0_16, %c0_17], %20 {strides = array<i32>} : memref<2x8x64xf32, #tpu.memory_space<vmem>>, vector<2x8x64xf32>,
    %c0_18 = arith.constant 0 : index
    %c1 = arith.constant 1 : index
    %c0_19 = arith.constant 0 : index
    %22 = vector.load %arg1[%c0_18, %c1, %c0_19] : memref<2x4x256xbf16, #tpu.memory_space<vmem>>, vector<2x1x256xbf16>
    %23 = vector.shape_cast %22 : vector<2x1x256xbf16> to vector<2x256xbf16>
    %c1_20 = arith.constant 1 : index
    %c0_21 = arith.constant 0 : index
    %c0_22 = arith.constant 0 : index
    %24 = vector.load %arg2[%c1_20, %c0_21, %c0_22] : memref<4x256x64xbf16, #tpu.memory_space<vmem>>, vector<1x256x64xbf16>
    %25 = vector.shape_cast %24 : vector<1x256x64xbf16> to vector<256x64xbf16>
    %cst_23 = arith.constant dense<0.000000e+00> : vector<2x64xf32>
    %26 = tpu.matmul %23, %25, %cst_23 {dimension_numbers = #tpu.dot_dimension_numbers<[1], [0], [0], [1], [0, 0, 1, 1], [], []>} : vector<2x256xbf16>, vector<256x64xbf16>, vector<2x64xf32> -> vector<2x64xf32>
    %c1_24 = arith.constant 1 : index
    %c0_25 = arith.constant 0 : index
    %c0_26 = arith.constant 0 : index
    %27 = vector.load %arg3[%c1_24, %c0_25, %c0_26] : memref<4x1x64xf32, #tpu.memory_space<vmem>>, vector<1x1x64xf32>
    %28 = vector.shape_cast %27 : vector<1x1x64xf32> to vector<1x64xf32>
    %29 = vector.broadcast %28 : vector<1x64xf32> to vector<2x64xf32>
    %30 = arith.addf %26, %29 : vector<2x64xf32>
    %c0_27 = arith.constant 0 : index
    %c0_28 = arith.constant 0 : index
    %c0_29 = arith.constant 0 : index
    %31 = vector.load %arg7[%c0_27, %c0_28, %c0_29] : memref<2x8x64xf32, #tpu.memory_space<vmem>>, vector<2x8x64xf32>
    %32 = vector.shape_cast %30 : vector<2x64xf32> to vector<2x1x64xf32>
    %c1_30 = arith.constant 1 : index
    %c0_31 = arith.constant 0 : index
    %c0_32 = arith.constant 0 : index
    %33 = vector.load %arg4[%c1_30, %c0_31, %c0_32] : memref<4x8x1xf32, #tpu.memory_space<vmem>>, vector<1x8x1xf32>
    %34 = vector.shape_cast %33 : vector<1x8x1xf32> to vector<8x1xf32>
    %35 = vector.shape_cast %34 : vector<8x1xf32> to vector<1x8x1xf32>
    %36 = vector.broadcast %32 : vector<2x1x64xf32> to vector<2x8x64xf32>
    %37 = vector.broadcast %35 : vector<1x8x1xf32> to vector<2x8x64xf32>
    %38 = arith.mulf %36, %37 : vector<2x8x64xf32>
    %39 = arith.addf %31, %38 : vector<2x8x64xf32>
    %c0_33 = arith.constant 0 : index
    %c0_34 = arith.constant 0 : index
    %c0_35 = arith.constant 0 : index
    %40 = vector.load %arg7[%c0_33, %c0_34, %c0_35] : memref<2x8x64xf32, #tpu.memory_space<vmem>>, vector<2x8x64xf32>
    tpu.vector_store %arg7[%c0_33, %c0_34, %c0_35], %39 {strides = array<i32>} : memref<2x8x64xf32, #tpu.memory_space<vmem>>, vector<2x8x64xf32>,
    %c0_36 = arith.constant 0 : index
    %c2 = arith.constant 2 : index
    %c0_37 = arith.constant 0 : index
    %41 = vector.load %arg1[%c0_36, %c2, %c0_37] : memref<2x4x256xbf16, #tpu.memory_space<vmem>>, vector<2x1x256xbf16>
    %42 = vector.shape_cast %41 : vector<2x1x256xbf16> to vector<2x256xbf16>
    %c2_38 = arith.constant 2 : index
    %c0_39 = arith.constant 0 : index
    %c0_40 = arith.constant 0 : index
    %43 = vector.load %arg2[%c2_38, %c0_39, %c0_40] : memref<4x256x64xbf16, #tpu.memory_space<vmem>>, vector<1x256x64xbf16>
    %44 = vector.shape_cast %43 : vector<1x256x64xbf16> to vector<256x64xbf16>
    %cst_41 = arith.constant dense<0.000000e+00> : vector<2x64xf32>
    %45 = tpu.matmul %42, %44, %cst_41 {dimension_numbers = #tpu.dot_dimension_numbers<[1], [0], [0], [1], [0, 0, 1, 1], [], []>} : vector<2x256xbf16>, vector<256x64xbf16>, vector<2x64xf32> -> vector<2x64xf32>
    %c2_42 = arith.constant 2 : index
    %c0_43 = arith.constant 0 : index
    %c0_44 = arith.constant 0 : index
    %46 = vector.load %arg3[%c2_42, %c0_43, %c0_44] : memref<4x1x64xf32, #tpu.memory_space<vmem>>, vector<1x1x64xf32>
    %47 = vector.shape_cast %46 : vector<1x1x64xf32> to vector<1x64xf32>
    %48 = vector.broadcast %47 : vector<1x64xf32> to vector<2x64xf32>
    %49 = arith.addf %45, %48 : vector<2x64xf32>
    %c0_45 = arith.constant 0 : index
    %c0_46 = arith.constant 0 : index
    %c0_47 = arith.constant 0 : index
    %50 = vector.load %arg7[%c0_45, %c0_46, %c0_47] : memref<2x8x64xf32, #tpu.memory_space<vmem>>, vector<2x8x64xf32>
    %51 = vector.shape_cast %49 : vector<2x64xf32> to vector<2x1x64xf32>
    %c2_48 = arith.constant 2 : index
    %c0_49 = arith.constant 0 : index
    %c0_50 = arith.constant 0 : index
    %52 = vector.load %arg4[%c2_48, %c0_49, %c0_50] : memref<4x8x1xf32, #tpu.memory_space<vmem>>, vector<1x8x1xf32>
    %53 = vector.shape_cast %52 : vector<1x8x1xf32> to vector<8x1xf32>
    %54 = vector.shape_cast %53 : vector<8x1xf32> to vector<1x8x1xf32>
    %55 = vector.broadcast %51 : vector<2x1x64xf32> to vector<2x8x64xf32>
    %56 = vector.broadcast %54 : vector<1x8x1xf32> to vector<2x8x64xf32>
    %57 = arith.mulf %55, %56 : vector<2x8x64xf32>
    %58 = arith.addf %50, %57 : vector<2x8x64xf32>
    %c0_51 = arith.constant 0 : index
    %c0_52 = arith.constant 0 : index
    %c0_53 = arith.constant 0 : index
    %59 = vector.load %arg7[%c0_51, %c0_52, %c0_53] : memref<2x8x64xf32, #tpu.memory_space<vmem>>, vector<2x8x64xf32>
    tpu.vector_store %arg7[%c0_51, %c0_52, %c0_53], %58 {strides = array<i32>} : memref<2x8x64xf32, #tpu.memory_space<vmem>>, vector<2x8x64xf32>,
    %c0_54 = arith.constant 0 : index
    %c3 = arith.constant 3 : index
    %c0_55 = arith.constant 0 : index
    %60 = vector.load %arg1[%c0_54, %c3, %c0_55] : memref<2x4x256xbf16, #tpu.memory_space<vmem>>, vector<2x1x256xbf16>
    %61 = vector.shape_cast %60 : vector<2x1x256xbf16> to vector<2x256xbf16>
    %c3_56 = arith.constant 3 : index
    %c0_57 = arith.constant 0 : index
    %c0_58 = arith.constant 0 : index
    %62 = vector.load %arg2[%c3_56, %c0_57, %c0_58] : memref<4x256x64xbf16, #tpu.memory_space<vmem>>, vector<1x256x64xbf16>
    %63 = vector.shape_cast %62 : vector<1x256x64xbf16> to vector<256x64xbf16>
    %cst_59 = arith.constant dense<0.000000e+00> : vector<2x64xf32>
    %64 = tpu.matmul %61, %63, %cst_59 {dimension_numbers = #tpu.dot_dimension_numbers<[1], [0], [0], [1], [0, 0, 1, 1], [], []>} : vector<2x256xbf16>, vector<256x64xbf16>, vector<2x64xf32> -> vector<2x64xf32>
    %c3_60 = arith.constant 3 : index
    %c0_61 = arith.constant 0 : index
    %c0_62 = arith.constant 0 : index
    %65 = vector.load %arg3[%c3_60, %c0_61, %c0_62] : memref<4x1x64xf32, #tpu.memory_space<vmem>>, vector<1x1x64xf32>
    %66 = vector.shape_cast %65 : vector<1x1x64xf32> to vector<1x64xf32>
    %67 = vector.broadcast %66 : vector<1x64xf32> to vector<2x64xf32>
    %68 = arith.addf %64, %67 : vector<2x64xf32>
    %c0_63 = arith.constant 0 : index
    %c0_64 = arith.constant 0 : index
    %c0_65 = arith.constant 0 : index
    %69 = vector.load %arg7[%c0_63, %c0_64, %c0_65] : memref<2x8x64xf32, #tpu.memory_space<vmem>>, vector<2x8x64xf32>
    %70 = vector.shape_cast %68 : vector<2x64xf32> to vector<2x1x64xf32>
    %c3_66 = arith.constant 3 : index
    %c0_67 = arith.constant 0 : index
    %c0_68 = arith.constant 0 : index
    %71 = vector.load %arg4[%c3_66, %c0_67, %c0_68] : memref<4x8x1xf32, #tpu.memory_space<vmem>>, vector<1x8x1xf32>
    %72 = vector.shape_cast %71 : vector<1x8x1xf32> to vector<8x1xf32>
    %73 = vector.shape_cast %72 : vector<8x1xf32> to vector<1x8x1xf32>
    %74 = vector.broadcast %70 : vector<2x1x64xf32> to vector<2x8x64xf32>
    %75 = vector.broadcast %73 : vector<1x8x1xf32> to vector<2x8x64xf32>
    %76 = arith.mulf %74, %75 : vector<2x8x64xf32>
    %77 = arith.addf %69, %76 : vector<2x8x64xf32>
    %c0_69 = arith.constant 0 : index
    %c0_70 = arith.constant 0 : index
    %c0_71 = arith.constant 0 : index
    %78 = vector.load %arg7[%c0_69, %c0_70, %c0_71] : memref<2x8x64xf32, #tpu.memory_space<vmem>>, vector<2x8x64xf32>
    tpu.vector_store %arg7[%c0_69, %c0_70, %c0_71], %77 {strides = array<i32>} : memref<2x8x64xf32, #tpu.memory_space<vmem>>, vector<2x8x64xf32>,
    %c0_i32_72 = arith.constant 0 : i32
    %79 = arith.cmpi eq, %arg0, %c0_i32_72 : i32
    %80 = arith.extui %79 : i1 to i32
    %c0_i32_73 = arith.constant 0 : i32
    %81 = arith.cmpi ne, %80, %c0_i32_73 : i32
    scf.if %81 {
      %c0_74 = arith.constant 0 : index
      %c0_75 = arith.constant 0 : index
      %c0_76 = arith.constant 0 : index
      %82 = vector.load %arg7[%c0_74, %c0_75, %c0_76] : memref<2x8x64xf32, #tpu.memory_space<vmem>>, vector<2x8x64xf32>
      %c0_77 = arith.constant 0 : index
      %c0_78 = arith.constant 0 : index
      %c0_79 = arith.constant 0 : index
      %83 = vector.load %arg6[%c0_77, %c0_78, %c0_79] : memref<2x8x64xf32, #tpu.memory_space<vmem>>, vector<2x8x64xf32>
      tpu.vector_store %arg6[%c0_77, %c0_78, %c0_79], %82 {strides = array<i32>} : memref<2x8x64xf32, #tpu.memory_space<vmem>>, vector<2x8x64xf32>,
    } else {
    }
    return
  }
  func.func @transform_0(%arg0: i32) -> (i32, i32, i32) {
    %c0_i32 = arith.constant 0 : i32
    %c0_i32_0 = arith.constant 0 : i32
    %c0_i32_1 = arith.constant 0 : i32
    return %c0_i32, %arg0, %c0_i32_0 : i32, i32, i32
  }
  func.func @transform_1(%arg0: i32) -> (i32, i32, i32) {
    %c0_i32 = arith.constant 0 : i32
    %c0_i32_0 = arith.constant 0 : i32
    %c0_i32_1 = arith.constant 0 : i32
    return %arg0, %c0_i32, %c0_i32_0 : i32, i32, i32
  }
  func.func @transform_2(%arg0: i32) -> (i32, i32, i32) {
    %c0_i32 = arith.constant 0 : i32
    %c0_i32_0 = arith.constant 0 : i32
    %c0_i32_1 = arith.constant 0 : i32
    return %arg0, %c0_i32, %c0_i32_0 : i32, i32, i32
  }
  func.func @transform_3(%arg0: i32) -> (i32, i32, i32) {
    %c0_i32 = arith.constant 0 : i32
    %c0_i32_0 = arith.constant 0 : i32
    %c0_i32_1 = arith.constant 0 : i32
    return %arg0, %c0_i32, %c0_i32_0 : i32, i32, i32
  }
  func.func @transform_4(%arg0: i32) -> (i32, i32, i32) {
    %c0_i32 = arith.constant 0 : i32
    %c0_i32_0 = arith.constant 0 : i32
    %c0_i32_1 = arith.constant 0 : i32
    %c0_i32_2 = arith.constant 0 : i32
    return %c0_i32, %c0_i32_0, %c0_i32_1 : i32, i32, i32
  }
  func.func @transform_5(%arg0: i32) -> (i32, i32, i32) {
    %c0_i32 = arith.constant 0 : i32
    %c0_i32_0 = arith.constant 0 : i32
    %c0_i32_1 = arith.constant 0 : i32
    %c0_i32_2 = arith.constant 0 : i32
    return %c0_i32, %c0_i32_0, %c0_i32_1 : i32, i32, i32
  }
}

</mosaic_0001>

<llo_original>
// kernel: linear_conv2d.1
$region0: #{linear_conv2d.1}
  #allocation0 [shape = 'u32[]', space=smem, size = 0x4, offset = 0x4, fixed_abs, tag = 'smem constant byte address 0x4 - core index']
  #allocation1 [shape = 'u32[144,128]{1,0:T(1,128)}', space=vmem, size = 0x12000, scoped, tag = 'internal scratch']
  #allocation2 [shape = 'f32[2,8,64]{2,1,0:T(8,128)}', space=vmem, size = 0x2000, scoped, tag = 'scratch operand']
  %s0 = inlined_call_operand.vmem [shape: bf16[2,4,256], index: 0, kind: input, shape index: {}]
  %s1 = inlined_call_operand.vmem [shape: bf16[4,256,64], index: 1, kind: input, shape index: {}]
  %s2 = inlined_call_operand.vmem [shape: f32[4,1,64], index: 2, kind: input, shape index: {}]
  %s3 = inlined_call_operand.vmem [shape: f32[4,8,1], index: 3, kind: input, shape index: {}]
  %s4 = inlined_call_operand.vmem [shape: f32[1,8,1], index: 4, kind: input, shape index: {}]
  %s5 = inlined_call_operand.vmem [shape: f32[2,8,64], index: 5, kind: output, shape index: {}]
  %s6 = sld [smem:[#allocation0]]
  $region38: #{linear_conv2d.1} parent=0
    _
  %s8 = ssub.s32 1, %s6
  %s9 = scalar_select 0, %s8, %s6
  // Predicated region
  $region2: #{linear_conv2d.1} parent=0 // pred_check
    _
  $region3: #{linear_conv2d.1} parent=0 // pred_check_branch
    %11 = sbr.rel (0) target = $region5
  $region4: #{linear_conv2d.1} parent=0 // pred_region
    _
  $region5: #{linear_conv2d.1} parent=0 // pred_fallthru
    _
  // Predicated region
  $region6: #{linear_conv2d.1} parent=0 // pred_check
    _
  $region7: #{linear_conv2d.1} parent=0 // pred_check_branch
    %13 = sbr.rel (0) target = $region9
  $region8: #{linear_conv2d.1} parent=0 // pred_region
    _
  $region9: #{linear_conv2d.1} parent=0 // pred_fallthru
    _
  // Predicated region
  $region10: #{linear_conv2d.1} parent=0 // pred_check
    _
  $region11: #{linear_conv2d.1} parent=0 // pred_check_branch
    %15 = sbr.rel (0) target = $region13
  $region12: #{linear_conv2d.1} parent=0 // pred_region
    _
  $region13: #{linear_conv2d.1} parent=0 // pred_fallthru
    _
  // Predicated region
  $region14: #{linear_conv2d.1} parent=0 // pred_check
    _
  $region15: #{linear_conv2d.1} parent=0 // pred_check_branch
    %17 = sbr.rel (0) target = $region17
  $region16: #{linear_conv2d.1} parent=0 // pred_region
    _
  $region17: #{linear_conv2d.1} parent=0 // pred_fallthru
    _
  // Predicated region
  $region18: #{linear_conv2d.1} parent=0 // pred_check
    _
  $region19: #{linear_conv2d.1} parent=0 // pred_check_branch
    %19 = sbr.rel (0) target = $region21
  $region20: #{linear_conv2d.1} parent=0 // pred_region
    _
  $region21: #{linear_conv2d.1} parent=0 // pred_fallthru
    _
  %p21 = scmp.eq.s32.totalorder 0, 0
  // Predicated region
  $region22: #{linear_conv2d.1} parent=0 // pred_check
    %p22 = pneg %p21
  $region23: #{linear_conv2d.1} parent=0 // pred_check_branch
    %24 = sbr.rel (%p22) target = $region25
  $region24: #{linear_conv2d.1} parent=0 // pred_region
    %v25 = vld [vmem:[%s4] sm:$0xff]
    %27 = vset.pattern.permute.xlu0 0
    %28 = vperm.xlu0 %27, %v25
    %v29 = vpop.permute.xlu0 %28
    %vm31 = vcmask 523264
    %32 = vst.msk [vmem:[#allocation2] sm:$0xff] %vm31, %v29
    %33 = vst.msk [vmem:[#allocation2 + $0x8] sm:$0xff] %vm31, %v29
  $region25: #{linear_conv2d.1} parent=0 // pred_fallthru
    _
  %v34 = vld [vmem:[%s0] sm:$0x5]
  %v35 = vld [vmem:[%s0 + $0x4] sm:$0x5]
  %v36 = vld [vmem:[%s1] sm:$0xf]
  %v37 = vld [vmem:[%s1 + $0x4] sm:$0xf]
  %v38 = vld [vmem:[%s1 + $0x8] sm:$0xf]
  %v39 = vld [vmem:[%s1 + $0xc] sm:$0xf]
  %v40 = vld [vmem:[%s1 + $0x10] sm:$0xf]
  %v41 = vld [vmem:[%s1 + $0x14] sm:$0xf]
  %v42 = vld [vmem:[%s1 + $0x18] sm:$0xf]
  %v43 = vld [vmem:[%s1 + $0x1c] sm:$0xf]
  %v44 = vld [vmem:[%s1 + $0x20] sm:$0xf]
  %v45 = vld [vmem:[%s1 + $0x24] sm:$0xf]
  %v46 = vld [vmem:[%s1 + $0x28] sm:$0xf]
  %v47 = vld [vmem:[%s1 + $0x2c] sm:$0xf]
  %v48 = vld [vmem:[%s1 + $0x30] sm:$0xf]
  %v49 = vld [vmem:[%s1 + $0x34] sm:$0xf]
  %v50 = vld [vmem:[%s1 + $0x38] sm:$0xf]
  %v51 = vld [vmem:[%s1 + $0x3c] sm:$0xf]
  %v52 = vld [vmem:[%s1 + $0x40] sm:$0xf]
  %v53 = vld [vmem:[%s1 + $0x44] sm:$0xf]
  %v54 = vld [vmem:[%s1 + $0x48] sm:$0xf]
  %v55 = vld [vmem:[%s1 + $0x4c] sm:$0xf]
  %v56 = vld [vmem:[%s1 + $0x50] sm:$0xf]
  %v57 = vld [vmem:[%s1 + $0x54] sm:$0xf]
  %v58 = vld [vmem:[%s1 + $0x58] sm:$0xf]
  %v59 = vld [vmem:[%s1 + $0x5c] sm:$0xf]
  %v60 = vld [vmem:[%s1 + $0x60] sm:$0xf]
  %v61 = vld [vmem:[%s1 + $0x64] sm:$0xf]
  %v62 = vld [vmem:[%s1 + $0x68] sm:$0xf]
  %v63 = vld [vmem:[%s1 + $0x6c] sm:$0xf]
  %v64 = vld [vmem:[%s1 + $0x70] sm:$0xf]
  %v65 = vld [vmem:[%s1 + $0x74] sm:$0xf]
  %v66 = vld [vmem:[%s1 + $0x78] sm:$0xf]
  %v67 = vld [vmem:[%s1 + $0x7c] sm:$0xf]
  %v68 = vld [vmem:[%s2] sm:$0x1]
  %v70 = vlaneseq
  %v71 = vshrl.u32 %v70, 7
  %v72 = vsub.s32 0, %v71
  %v73 = vrot.slane %v68, %v72
  %v78 = vunpack.c.l.s4 1983009808
  %v79 = vunpack.c.0.s8 %v78
  %v80 = vlaneseq
  %v81 = vshrl.u32 %v80, 7
  %v82 = vsub.s32 %v79, %v81
  %v83 = vrot.slane %v34, %v82
  %v84 = vcombine.high %v83, %v83
  %v86 = vunpack.c.l.s4 1983009808
  %v87 = vunpack.c.0.s8 %v86
  %v88 = vlaneseq
  %v89 = vshrl.u32 %v88, 7
  %v90 = vsub.s32 %v87, %v89
  %v91 = vrot.slane %v35, %v90
  %v92 = vcombine.high %v91, %v91
  %v93 = vunpack.c.l.b16 %v83
  %v94 = vunpack.c.l.b16 %v84
  %v95 = vunpack.c.l.b16 %v91
  %v96 = vunpack.c.l.b16 %v92
  %v97 = vrot.slane %v95, 7
  %vm98 = vcmask 1041409
  %v99 = vsel %vm98, %v97, %v93
  %v100 = vrot.slane %v96, 7
  %v101 = vsel %vm98, %v100, %v94
  %v102 = vpack.c.b16 %v99, %v99
  %v103 = vpack.c.b16 %v101, %v101
  %v138 = vunpack.c.l.b16 %v36
  %v139 = vunpack.c.l.b16 %v37
  %v140 = vunpack.c.l.b16 %v38
  %v141 = vunpack.c.l.b16 %v39
  %v142 = vunpack.c.l.b16 %v40
  %v143 = vunpack.c.l.b16 %v41
  %v144 = vunpack.c.l.b16 %v42
  %v145 = vunpack.c.l.b16 %v43
  %v146 = vunpack.c.l.b16 %v44
  %v147 = vunpack.c.l.b16 %v45
  %v148 = vunpack.c.l.b16 %v46
  %v149 = vunpack.c.l.b16 %v47
  %v150 = vunpack.c.l.b16 %v48
  %v151 = vunpack.c.l.b16 %v49
  %v152 = vunpack.c.l.b16 %v50
  %v153 = vunpack.c.l.b16 %v51
  %v154 = vunpack.c.l.b16 %v52
  %v155 = vunpack.c.l.b16 %v53
  %v156 = vunpack.c.l.b16 %v54
  %v157 = vunpack.c.l.b16 %v55
  %v158 = vunpack.c.l.b16 %v56
  %v159 = vunpack.c.l.b16 %v57
  %v160 = vunpack.c.l.b16 %v58
  %v161 = vunpack.c.l.b16 %v59
  %v162 = vunpack.c.l.b16 %v60
  %v163 = vunpack.c.l.b16 %v61
  %v164 = vunpack.c.l.b16 %v62
  %v165 = vunpack.c.l.b16 %v63
  %v166 = vunpack.c.l.b16 %v64
  %v167 = vunpack.c.l.b16 %v65
  %v168 = vunpack.c.l.b16 %v66
  %v169 = vunpack.c.l.b16 %v67
  %v170 = vpack.c.b16 %v139, %v138
  %v171 = vpack.c.b16 %v141, %v140
  %v172 = vpack.c.b16 %v143, %v142
  %v173 = vpack.c.b16 %v145, %v144
  %v174 = vpack.c.b16 %v147, %v146
  %v175 = vpack.c.b16 %v149, %v148
  %v176 = vpack.c.b16 %v151, %v150
  %v177 = vpack.c.b16 %v153, %v152
  %v178 = vpack.c.b16 %v155, %v154
  %v179 = vpack.c.b16 %v157, %v156
  %v180 = vpack.c.b16 %v159, %v158
  %v181 = vpack.c.b16 %v161, %v160
  %v182 = vpack.c.b16 %v163, %v162
  %v183 = vpack.c.b16 %v165, %v164
  %v184 = vpack.c.b16 %v167, %v166
  %v185 = vpack.c.b16 %v169, %v168
  %202 = vmatprep.subr.bf16.mxu0 0
  %203 = vmatpush1.bf16.msra.mxu0 %v170
  %204 = vmatprep.subr.bf16.mxu0 0
  %205 = vmatpush1.bf16.msra.mxu0 %v171
  %206 = vmatprep.subr.bf16.mxu0 0
  %207 = vmatpush1.bf16.msra.mxu0 %v172
  %208 = vmatprep.subr.bf16.mxu0 0
  %209 = vmatpush1.bf16.msra.mxu0 %v173
  %210 = vmatprep.subr.bf16.mxu0 0
  %211 = vmatpush1.bf16.msra.mxu0 %v174
  %212 = vmatprep.subr.bf16.mxu0 0
  %213 = vmatpush1.bf16.msra.mxu0 %v175
  %214 = vmatprep.subr.bf16.mxu0 0
  %215 = vmatpush1.bf16.msra.mxu0 %v176
  %216 = vmatprep.subr.bf16.mxu0 0
  %217 = vmatpush1.bf16.msra.mxu0 %v177
  %218 = vmatprep.subr.bf16.mxu0 0
  %219 = vmatpush1.bf16.msra.mxu0 %v178
  %220 = vmatprep.subr.bf16.mxu0 0
  %221 = vmatpush1.bf16.msra.mxu0 %v179
  %222 = vmatprep.subr.bf16.mxu0 0
  %223 = vmatpush1.bf16.msra.mxu0 %v180
  %224 = vmatprep.subr.bf16.mxu0 0
  %225 = vmatpush1.bf16.msra.mxu0 %v181
  %226 = vmatprep.subr.bf16.mxu0 0
  %227 = vmatpush1.bf16.msra.mxu0 %v182
  %228 = vmatprep.subr.bf16.mxu0 0
  %229 = vmatpush1.bf16.msra.mxu0 %v183
  %230 = vmatprep.subr.bf16.mxu0 0
  %231 = vmatpush1.bf16.msra.mxu0 %v184
  %232 = vmatprep.subr.bf16.mxu0 0
  %233 = vmatpush1.bf16.msra.mxu0 %v185
  %234 = vmatprep.mubr.bf16.mxu0 %v103
  %235 = vmatmul.mubr.bf16.gmra.mrb[0].mxu0 %v102
  %v236 = vpop.f32.mrb[0].mxu0
  %v237 = vadd.f32 %v73, %v236
  %v238 = vpop.f32.mrb[0].mxu0
  %v239 = vpop.f32.mrb[0].mxu0
  %v240 = vpop.f32.mrb[0].mxu0
  %241 = vdwg.mxu0
  %v242 = vld [vmem:[#allocation2] sm:$0xff]
  %v243 = vld [vmem:[#allocation2 + $0x8] sm:$0xff]
  %v246 = vunpack.c.l.s4 1966171168
  %v247 = vunpack.c.0.s8 %v246
  %v248 = vlaneseq
  %v249 = vshrl.u32 %v248, 7
  %v250 = vsub.s32 %v247, %v249
  %v251 = vrot.slane %v237, %v250
  %v252 = vcombine.high %v251, %v251
  %v254 = vunpack.c.l.s4 1966171168
  %v255 = vunpack.c.0.s8 %v254
  %v256 = vlaneseq
  %v257 = vshrl.u32 %v256, 7
  %v258 = vsub.s32 %v255, %v257
  %v259 = vrot.slane %v251, %v258
  %v261 = vunpack.c.l.s4 1966171168
  %v262 = vunpack.c.0.s8 %v261
  %v263 = vlaneseq
  %v264 = vshrl.u32 %v263, 7
  %v265 = vsub.s32 %v262, %v264
  %v266 = vrot.slane %v252, %v265
  %v267 = vld [vmem:[%s3] sm:$0xff]
  %v268 = vlaneseq
  %v269 = vshrl.u32 %v268, 7
  %v270 = vsub.s32 0, %v269
  %v271 = vrot.slane %v259, %v270
  %v272 = vlaneseq
  %v273 = vshrl.u32 %v272, 7
  %v274 = vsub.s32 0, %v273
  %v275 = vrot.slane %v266, %v274
  %279 = vset.pattern.permute.xlu0 0
  %280 = vperm.xlu0 %279, %v267
  %v281 = vpop.permute.xlu0 %280
  %v283 = vmul.f32 %v271, %v281
  %v284 = vmul.f32 %v275, %v281
  %v285 = vadd.f32 %v242, %v283
  %v286 = vadd.f32 %v243, %v284
  %vm287 = vcmask 523264
  %288 = vst.msk [vmem:[#allocation2] sm:$0xff] %vm287, %v285
  %289 = vst.msk [vmem:[#allocation2 + $0x8] sm:$0xff] %vm287, %v286
  %v290 = vld [vmem:[%s0] sm:$0x5]
  %v291 = vld [vmem:[%s0 + $0x4] sm:$0x5]
  %s292 = scalar_lea.vmem %s1, 128
  %v293 = vld [vmem:[%s292] sm:$0xf]
  %v294 = vld [vmem:[%s292 + $0x4] sm:$0xf]
  %v295 = vld [vmem:[%s292 + $0x8] sm:$0xf]
  %v296 = vld [vmem:[%s292 + $0xc] sm:$0xf]
  %v297 = vld [vmem:[%s292 + $0x10] sm:$0xf]
  %v298 = vld [vmem:[%s292 + $0x14] sm:$0xf]
  %v299 = vld [vmem:[%s292 + $0x18] sm:$0xf]
  %v300 = vld [vmem:[%s292 + $0x1c] sm:$0xf]
  %v301 = vld [vmem:[%s292 + $0x20] sm:$0xf]
  %v302 = vld [vmem:[%s292 + $0x24] sm:$0xf]
  %v303 = vld [vmem:[%s292 + $0x28] sm:$0xf]
  %v304 = vld [vmem:[%s292 + $0x2c] sm:$0xf]
  %v305 = vld [vmem:[%s292 + $0x30] sm:$0xf]
  %v306 = vld [vmem:[%s292 + $0x34] sm:$0xf]
  %v307 = vld [vmem:[%s292 + $0x38] sm:$0xf]
  %v308 = vld [vmem:[%s292 + $0x3c] sm:$0xf]
  %v309 = vld [vmem:[%s292 + $0x40] sm:$0xf]
  %v310 = vld [vmem:[%s292 + $0x44] sm:$0xf]
  %v311 = vld [vmem:[%s292 + $0x48] sm:$0xf]
  %v312 = vld [vmem:[%s292 + $0x4c] sm:$0xf]
  %v313 = vld [vmem:[%s292 + $0x50] sm:$0xf]
  %v314 = vld [vmem:[%s292 + $0x54] sm:$0xf]
  %v315 = vld [vmem:[%s292 + $0x58] sm:$0xf]
  %v316 = vld [vmem:[%s292 + $0x5c] sm:$0xf]
  %v317 = vld [vmem:[%s292 + $0x60] sm:$0xf]
  %v318 = vld [vmem:[%s292 + $0x64] sm:$0xf]
  %v319 = vld [vmem:[%s292 + $0x68] sm:$0xf]
  %v320 = vld [vmem:[%s292 + $0x6c] sm:$0xf]
  %v321 = vld [vmem:[%s292 + $0x70] sm:$0xf]
  %v322 = vld [vmem:[%s292 + $0x74] sm:$0xf]
  %v323 = vld [vmem:[%s292 + $0x78] sm:$0xf]
  %v324 = vld [vmem:[%s292 + $0x7c] sm:$0xf]
  %s325 = scalar_lea.vmem %s2, 1
  %v326 = vld [vmem:[%s325] sm:$0x1]
  %v328 = vlaneseq
  %v329 = vshrl.u32 %v328, 7
  %v330 = vsub.s32 0, %v329
  %v331 = vrot.slane %v326, %v330
  %v336 = vunpack.c.l.s4 1983009808
  %v337 = vunpack.c.0.s8 %v336
  %v338 = vlaneseq
  %v339 = vshrl.u32 %v338, 7
  %v340 = vsub.s32 %v337, %v339
  %v341 = vrot.slane %v290, %v340
  %v342 = vcombine.high %v341, %v341
  %v344 = vunpack.c.l.s4 1983009808
  %v345 = vunpack.c.0.s8 %v344
  %v346 = vlaneseq
  %v347 = vshrl.u32 %v346, 7
  %v348 = vsub.s32 %v345, %v347
  %v349 = vrot.slane %v291, %v348
  %v350 = vcombine.high %v349, %v349
  %v351 = vunpack.c.l.b16 %v341
  %v352 = vunpack.c.l.b16 %v342
  %v353 = vunpack.c.l.b16 %v349
  %v354 = vunpack.c.l.b16 %v350
  %v355 = vrot.slane %v351, 1
  %v356 = vsel %vm98, %v353, %v355
  %v357 = vrot.slane %v352, 1
  %v358 = vsel %vm98, %v354, %v357
  %v359 = vpack.c.b16 %v356, %v356
  %v360 = vpack.c.b16 %v358, %v358
  %v395 = vunpack.c.l.b16 %v293
  %v396 = vunpack.c.l.b16 %v294
  %v397 = vunpack.c.l.b16 %v295
  %v398 = vunpack.c.l.b16 %v296
  %v399 = vunpack.c.l.b16 %v297
  %v400 = vunpack.c.l.b16 %v298
  %v401 = vunpack.c.l.b16 %v299
  %v402 = vunpack.c.l.b16 %v300
  %v403 = vunpack.c.l.b16 %v301
  %v404 = vunpack.c.l.b16 %v302
  %v405 = vunpack.c.l.b16 %v303
  %v406 = vunpack.c.l.b16 %v304
  %v407 = vunpack.c.l.b16 %v305
  %v408 = vunpack.c.l.b16 %v306
  %v409 = vunpack.c.l.b16 %v307
  %v410 = vunpack.c.l.b16 %v308
  %v411 = vunpack.c.l.b16 %v309
  %v412 = vunpack.c.l.b16 %v310
  %v413 = vunpack.c.l.b16 %v311
  %v414 = vunpack.c.l.b16 %v312
  %v415 = vunpack.c.l.b16 %v313
  %v416 = vunpack.c.l.b16 %v314
  %v417 = vunpack.c.l.b16 %v315
  %v418 = vunpack.c.l.b16 %v316
  %v419 = vunpack.c.l.b16 %v317
  %v420 = vunpack.c.l.b16 %v318
  %v421 = vunpack.c.l.b16 %v319
  %v422 = vunpack.c.l.b16 %v320
  %v423 = vunpack.c.l.b16 %v321
  %v424 = vunpack.c.l.b16 %v322
  %v425 = vunpack.c.l.b16 %v323
  %v426 = vunpack.c.l.b16 %v324
  %v427 = vpack.c.b16 %v396, %v395
  %v428 = vpack.c.b16 %v398, %v397
  %v429 = vpack.c.b16 %v400, %v399
  %v430 = vpack.c.b16 %v402, %v401
  %v431 = vpack.c.b16 %v404, %v403
  %v432 = vpack.c.b16 %v406, %v405
  %v433 = vpack.c.b16 %v408, %v407
  %v434 = vpack.c.b16 %v410, %v409
  %v435 = vpack.c.b16 %v412, %v411
  %v436 = vpack.c.b16 %v414, %v413
  %v437 = vpack.c.b16 %v416, %v415
  %v438 = vpack.c.b16 %v418, %v417
  %v439 = vpack.c.b16 %v420, %v419
  %v440 = vpack.c.b16 %v422, %v421
  %v441 = vpack.c.b16 %v424, %v423
  %v442 = vpack.c.b16 %v426, %v425
  %459 = vmatprep.subr.bf16.mxu0 0
  %460 = vmatpush1.bf16.msra.mxu0 %v427
  %461 = vmatprep.subr.bf16.mxu0 0
  %462 = vmatpush1.bf16.msra.mxu0 %v428
  %463 = vmatprep.subr.bf16.mxu0 0
  %464 = vmatpush1.bf16.msra.mxu0 %v429
  %465 = vmatprep.subr.bf16.mxu0 0
  %466 = vmatpush1.bf16.msra.mxu0 %v430
  %467 = vmatprep.subr.bf16.mxu0 0
  %468 = vmatpush1.bf16.msra.mxu0 %v431
  %469 = vmatprep.subr.bf16.mxu0 0
  %470 = vmatpush1.bf16.msra.mxu0 %v432
  %471 = vmatprep.subr.bf16.mxu0 0
  %472 = vmatpush1.bf16.msra.mxu0 %v433
  %473 = vmatprep.subr.bf16.mxu0 0
  %474 = vmatpush1.bf16.msra.mxu0 %v434
  %475 = vmatprep.subr.bf16.mxu0 0
  %476 = vmatpush1.bf16.msra.mxu0 %v435
  %477 = vmatprep.subr.bf16.mxu0 0
  %478 = vmatpush1.bf16.msra.mxu0 %v436
  %479 = vmatprep.subr.bf16.mxu0 0
  %480 = vmatpush1.bf16.msra.mxu0 %v437
  %481 = vmatprep.subr.bf16.mxu0 0
  %482 = vmatpush1.bf16.msra.mxu0 %v438
  %483 = vmatprep.subr.bf16.mxu0 0
  %484 = vmatpush1.bf16.msra.mxu0 %v439
  %485 = vmatprep.subr.bf16.mxu0 0
  %486 = vmatpush1.bf16.msra.mxu0 %v440
  %487 = vmatprep.subr.bf16.mxu0 0
  %488 = vmatpush1.bf16.msra.mxu0 %v441
  %489 = vmatprep.subr.bf16.mxu0 0
  %490 = vmatpush1.bf16.msra.mxu0 %v442
  %491 = vmatprep.mubr.bf16.mxu0 %v360
  %492 = vmatmul.mubr.bf16.gmra.mrb[0].mxu0 %v359
  %v493 = vpop.f32.mrb[0].mxu0
  %v494 = vadd.f32 %v331, %v493
  %v495 = vpop.f32.mrb[0].mxu0
  %v496 = vpop.f32.mrb[0].mxu0
  %v497 = vpop.f32.mrb[0].mxu0
  %498 = vdwg.mxu0
  %v499 = vld [vmem:[#allocation2] sm:$0xff]
  %v500 = vld [vmem:[#allocation2 + $0x8] sm:$0xff]
  %v503 = vunpack.c.l.s4 1966171168
  %v504 = vunpack.c.0.s8 %v503
  %v505 = vlaneseq
  %v506 = vshrl.u32 %v505, 7
  %v507 = vsub.s32 %v504, %v506
  %v508 = vrot.slane %v494, %v507
  %v509 = vcombine.high %v508, %v508
  %v511 = vunpack.c.l.s4 1966171168
  %v512 = vunpack.c.0.s8 %v511
  %v513 = vlaneseq
  %v514 = vshrl.u32 %v513, 7
  %v515 = vsub.s32 %v512, %v514
  %v516 = vrot.slane %v508, %v515
  %v518 = vunpack.c.l.s4 1966171168
  %v519 = vunpack.c.0.s8 %v518
  %v520 = vlaneseq
  %v521 = vshrl.u32 %v520, 7
  %v522 = vsub.s32 %v519, %v521
  %v523 = vrot.slane %v509, %v522
  %s524 = scalar_lea.vmem %s3, 8
  %v525 = vld [vmem:[%s524] sm:$0xff]
  %v526 = vlaneseq
  %v527 = vshrl.u32 %v526, 7
  %v528 = vsub.s32 0, %v527
  %v529 = vrot.slane %v516, %v528
  %v530 = vlaneseq
  %v531 = vshrl.u32 %v530, 7
  %v532 = vsub.s32 0, %v531
  %v533 = vrot.slane %v523, %v532
  %537 = vset.pattern.permute.xlu0 0
  %538 = vperm.xlu0 %537, %v525
  %v539 = vpop.permute.xlu0 %538
  %v541 = vmul.f32 %v529, %v539
  %v542 = vmul.f32 %v533, %v539
  %v543 = vadd.f32 %v499, %v541
  %v544 = vadd.f32 %v500, %v542
  %545 = vst.msk [vmem:[#allocation2] sm:$0xff] %vm287, %v543
  %546 = vst.msk [vmem:[#allocation2 + $0x8] sm:$0xff] %vm287, %v544
  %v547 = vld [vmem:[%s0] sm:$0xa]
  %v548 = vld [vmem:[%s0 + $0x4] sm:$0xa]
  %s549 = scalar_lea.vmem %s1, 256
  %v550 = vld [vmem:[%s549] sm:$0xf]
  %v551 = vld [vmem:[%s549 + $0x4] sm:$0xf]
  %v552 = vld [vmem:[%s549 + $0x8] sm:$0xf]
  %v553 = vld [vmem:[%s549 + $0xc] sm:$0xf]
  %v554 = vld [vmem:[%s549 + $0x10] sm:$0xf]
  %v555 = vld [vmem:[%s549 + $0x14] sm:$0xf]
  %v556 = vld [vmem:[%s549 + $0x18] sm:$0xf]
  %v557 = vld [vmem:[%s549 + $0x1c] sm:$0xf]
  %v558 = vld [vmem:[%s549 + $0x20] sm:$0xf]
  %v559 = vld [vmem:[%s549 + $0x24] sm:$0xf]
  %v560 = vld [vmem:[%s549 + $0x28] sm:$0xf]
  %v561 = vld [vmem:[%s549 + $0x2c] sm:$0xf]
  %v562 = vld [vmem:[%s549 + $0x30] sm:$0xf]
  %v563 = vld [vmem:[%s549 + $0x34] sm:$0xf]
  %v564 = vld [vmem:[%s549 + $0x38] sm:$0xf]
  %v565 = vld [vmem:[%s549 + $0x3c] sm:$0xf]
  %v566 = vld [vmem:[%s549 + $0x40] sm:$0xf]
  %v567 = vld [vmem:[%s549 + $0x44] sm:$0xf]
  %v568 = vld [vmem:[%s549 + $0x48] sm:$0xf]
  %v569 = vld [vmem:[%s549 + $0x4c] sm:$0xf]
  %v570 = vld [vmem:[%s549 + $0x50] sm:$0xf]
  %v571 = vld [vmem:[%s549 + $0x54] sm:$0xf]
  %v572 = vld [vmem:[%s549 + $0x58] sm:$0xf]
  %v573 = vld [vmem:[%s549 + $0x5c] sm:$0xf]
  %v574 = vld [vmem:[%s549 + $0x60] sm:$0xf]
  %v575 = vld [vmem:[%s549 + $0x64] sm:$0xf]
  %v576 = vld [vmem:[%s549 + $0x68] sm:$0xf]
  %v577 = vld [vmem:[%s549 + $0x6c] sm:$0xf]
  %v578 = vld [vmem:[%s549 + $0x70] sm:$0xf]
  %v579 = vld [vmem:[%s549 + $0x74] sm:$0xf]
  %v580 = vld [vmem:[%s549 + $0x78] sm:$0xf]
  %v581 = vld [vmem:[%s549 + $0x7c] sm:$0xf]
  %s582 = scalar_lea.vmem %s2, 2
  %v583 = vld [vmem:[%s582] sm:$0x1]
  %v585 = vlaneseq
  %v586 = vshrl.u32 %v585, 7
  %v587 = vsub.s32 0, %v586
  %v588 = vrot.slane %v583, %v587
  %v593 = vunpack.c.l.s4 1983009808
  %v594 = vunpack.c.0.s8 %v593
  %v595 = vlaneseq
  %v596 = vshrl.u32 %v595, 7
  %v597 = vsub.s32 %v594, %v596
  %v598 = vrot.slane %v547, %v597
  %v599 = vcombine.high %v598, %v598
  %v601 = vunpack.c.l.s4 1983009808
  %v602 = vunpack.c.0.s8 %v601
  %v603 = vlaneseq
  %v604 = vshrl.u32 %v603, 7
  %v605 = vsub.s32 %v602, %v604
  %v606 = vrot.slane %v548, %v605
  %v607 = vcombine.high %v606, %v606
  %v608 = vunpack.c.l.b16 %v598
  %v609 = vunpack.c.l.b16 %v599
  %v610 = vunpack.c.l.b16 %v606
  %v611 = vunpack.c.l.b16 %v607
  %v612 = vrot.slane %v608, 2
  %v613 = vrot.slane %v610, 1
  %v614 = vsel %vm98, %v613, %v612
  %v615 = vrot.slane %v609, 2
  %v616 = vrot.slane %v611, 1
  %v617 = vsel %vm98, %v616, %v615
  %v618 = vpack.c.b16 %v614, %v614
  %v619 = vpack.c.b16 %v617, %v617
  %v654 = vunpack.c.l.b16 %v550
  %v655 = vunpack.c.l.b16 %v551
  %v656 = vunpack.c.l.b16 %v552
  %v657 = vunpack.c.l.b16 %v553
  %v658 = vunpack.c.l.b16 %v554
  %v659 = vunpack.c.l.b16 %v555
  %v660 = vunpack.c.l.b16 %v556
  %v661 = vunpack.c.l.b16 %v557
  %v662 = vunpack.c.l.b16 %v558
  %v663 = vunpack.c.l.b16 %v559
  %v664 = vunpack.c.l.b16 %v560
  %v665 = vunpack.c.l.b16 %v561
  %v666 = vunpack.c.l.b16 %v562
  %v667 = vunpack.c.l.b16 %v563
  %v668 = vunpack.c.l.b16 %v564
  %v669 = vunpack.c.l.b16 %v565
  %v670 = vunpack.c.l.b16 %v566
  %v671 = vunpack.c.l.b16 %v567
  %v672 = vunpack.c.l.b16 %v568
  %v673 = vunpack.c.l.b16 %v569
  %v674 = vunpack.c.l.b16 %v570
  %v675 = vunpack.c.l.b16 %v571
  %v676 = vunpack.c.l.b16 %v572
  %v677 = vunpack.c.l.b16 %v573
  %v678 = vunpack.c.l.b16 %v574
  %v679 = vunpack.c.l.b16 %v575
  %v680 = vunpack.c.l.b16 %v576
  %v681 = vunpack.c.l.b16 %v577
  %v682 = vunpack.c.l.b16 %v578
  %v683 = vunpack.c.l.b16 %v579
  %v684 = vunpack.c.l.b16 %v580
  %v685 = vunpack.c.l.b16 %v581
  %v686 = vpack.c.b16 %v655, %v654
  %v687 = vpack.c.b16 %v657, %v656
  %v688 = vpack.c.b16 %v659, %v658
  %v689 = vpack.c.b16 %v661, %v660
  %v690 = vpack.c.b16 %v663, %v662
  %v691 = vpack.c.b16 %v665, %v664
  %v692 = vpack.c.b16 %v667, %v666
  %v693 = vpack.c.b16 %v669, %v668
  %v694 = vpack.c.b16 %v671, %v670
  %v695 = vpack.c.b16 %v673, %v672
  %v696 = vpack.c.b16 %v675, %v674
  %v697 = vpack.c.b16 %v677, %v676
  %v698 = vpack.c.b16 %v679, %v678
  %v699 = vpack.c.b16 %v681, %v680
  %v700 = vpack.c.b16 %v683, %v682
  %v701 = vpack.c.b16 %v685, %v684
  %718 = vmatprep.subr.bf16.mxu0 0
  %719 = vmatpush1.bf16.msra.mxu0 %v686
  %720 = vmatprep.subr.bf16.mxu0 0
  %721 = vmatpush1.bf16.msra.mxu0 %v687
  %722 = vmatprep.subr.bf16.mxu0 0
  %723 = vmatpush1.bf16.msra.mxu0 %v688
  %724 = vmatprep.subr.bf16.mxu0 0
  %725 = vmatpush1.bf16.msra.mxu0 %v689
  %726 = vmatprep.subr.bf16.mxu0 0
  %727 = vmatpush1.bf16.msra.mxu0 %v690
  %728 = vmatprep.subr.bf16.mxu0 0
  %729 = vmatpush1.bf16.msra.mxu0 %v691
  %730 = vmatprep.subr.bf16.mxu0 0
  %731 = vmatpush1.bf16.msra.mxu0 %v692
  %732 = vmatprep.subr.bf16.mxu0 0
  %733 = vmatpush1.bf16.msra.mxu0 %v693
  %734 = vmatprep.subr.bf16.mxu0 0
  %735 = vmatpush1.bf16.msra.mxu0 %v694
  %736 = vmatprep.subr.bf16.mxu0 0
  %737 = vmatpush1.bf16.msra.mxu0 %v695
  %738 = vmatprep.subr.bf16.mxu0 0
  %739 = vmatpush1.bf16.msra.mxu0 %v696
  %740 = vmatprep.subr.bf16.mxu0 0
  %741 = vmatpush1.bf16.msra.mxu0 %v697
  %742 = vmatprep.subr.bf16.mxu0 0
  %743 = vmatpush1.bf16.msra.mxu0 %v698
  %744 = vmatprep.subr.bf16.mxu0 0
  %745 = vmatpush1.bf16.msra.mxu0 %v699
  %746 = vmatprep.subr.bf16.mxu0 0
  %747 = vmatpush1.bf16.msra.mxu0 %v700
  %748 = vmatprep.subr.bf16.mxu0 0
  %749 = vmatpush1.bf16.msra.mxu0 %v701
  %750 = vmatprep.mubr.bf16.mxu0 %v619
  %751 = vmatmul.mubr.bf16.gmra.mrb[0].mxu0 %v618
  %v752 = vpop.f32.mrb[0].mxu0
  %v753 = vadd.f32 %v588, %v752
  %v754 = vpop.f32.mrb[0].mxu0
  %v755 = vpop.f32.mrb[0].mxu0
  %v756 = vpop.f32.mrb[0].mxu0
  %757 = vdwg.mxu0
  %v758 = vld [vmem:[#allocation2] sm:$0xff]
  %v759 = vld [vmem:[#allocation2 + $0x8] sm:$0xff]
  %v762 = vunpack.c.l.s4 1966171168
  %v763 = vunpack.c.0.s8 %v762
  %v764 = vlaneseq
  %v765 = vshrl.u32 %v764, 7
  %v766 = vsub.s32 %v763, %v765
  %v767 = vrot.slane %v753, %v766
  %v768 = vcombine.high %v767, %v767
  %v770 = vunpack.c.l.s4 1966171168
  %v771 = vunpack.c.0.s8 %v770
  %v772 = vlaneseq
  %v773 = vshrl.u32 %v772, 7
  %v774 = vsub.s32 %v771, %v773
  %v775 = vrot.slane %v767, %v774
  %v777 = vunpack.c.l.s4 1966171168
  %v778 = vunpack.c.0.s8 %v777
  %v779 = vlaneseq
  %v780 = vshrl.u32 %v779, 7
  %v781 = vsub.s32 %v778, %v780
  %v782 = vrot.slane %v768, %v781
  %s783 = scalar_lea.vmem %s3, 16
  %v784 = vld [vmem:[%s783] sm:$0xff]
  %v785 = vlaneseq
  %v786 = vshrl.u32 %v785, 7
  %v787 = vsub.s32 0, %v786
  %v788 = vrot.slane %v775, %v787
  %v789 = vlaneseq
  %v790 = vshrl.u32 %v789, 7
  %v791 = vsub.s32 0, %v790
  %v792 = vrot.slane %v782, %v791
  %796 = vset.pattern.permute.xlu0 0
  %797 = vperm.xlu0 %796, %v784
  %v798 = vpop.permute.xlu0 %797
  %v800 = vmul.f32 %v788, %v798
  %v801 = vmul.f32 %v792, %v798
  %v802 = vadd.f32 %v758, %v800
  %v803 = vadd.f32 %v759, %v801
  %804 = vst.msk [vmem:[#allocation2] sm:$0xff] %vm287, %v802
  %805 = vst.msk [vmem:[#allocation2 + $0x8] sm:$0xff] %vm287, %v803
  %v806 = vld [vmem:[%s0] sm:$0xa]
  %v807 = vld [vmem:[%s0 + $0x4] sm:$0xa]
  %s808 = scalar_lea.vmem %s1, 384
  %v809 = vld [vmem:[%s808] sm:$0xf]
  %v810 = vld [vmem:[%s808 + $0x4] sm:$0xf]
  %v811 = vld [vmem:[%s808 + $0x8] sm:$0xf]
  %v812 = vld [vmem:[%s808 + $0xc] sm:$0xf]
  %v813 = vld [vmem:[%s808 + $0x10] sm:$0xf]
  %v814 = vld [vmem:[%s808 + $0x14] sm:$0xf]
  %v815 = vld [vmem:[%s808 + $0x18] sm:$0xf]
  %v816 = vld [vmem:[%s808 + $0x1c] sm:$0xf]
  %v817 = vld [vmem:[%s808 + $0x20] sm:$0xf]
  %v818 = vld [vmem:[%s808 + $0x24] sm:$0xf]
  %v819 = vld [vmem:[%s808 + $0x28] sm:$0xf]
  %v820 = vld [vmem:[%s808 + $0x2c] sm:$0xf]
  %v821 = vld [vmem:[%s808 + $0x30] sm:$0xf]
  %v822 = vld [vmem:[%s808 + $0x34] sm:$0xf]
  %v823 = vld [vmem:[%s808 + $0x38] sm:$0xf]
  %v824 = vld [vmem:[%s808 + $0x3c] sm:$0xf]
  %v825 = vld [vmem:[%s808 + $0x40] sm:$0xf]
  %v826 = vld [vmem:[%s808 + $0x44] sm:$0xf]
  %v827 = vld [vmem:[%s808 + $0x48] sm:$0xf]
  %v828 = vld [vmem:[%s808 + $0x4c] sm:$0xf]
  %v829 = vld [vmem:[%s808 + $0x50] sm:$0xf]
  %v830 = vld [vmem:[%s808 + $0x54] sm:$0xf]
  %v831 = vld [vmem:[%s808 + $0x58] sm:$0xf]
  %v832 = vld [vmem:[%s808 + $0x5c] sm:$0xf]
  %v833 = vld [vmem:[%s808 + $0x60] sm:$0xf]
  %v834 = vld [vmem:[%s808 + $0x64] sm:$0xf]
  %v835 = vld [vmem:[%s808 + $0x68] sm:$0xf]
  %v836 = vld [vmem:[%s808 + $0x6c] sm:$0xf]
  %v837 = vld [vmem:[%s808 + $0x70] sm:$0xf]
  %v838 = vld [vmem:[%s808 + $0x74] sm:$0xf]
  %v839 = vld [vmem:[%s808 + $0x78] sm:$0xf]
  %v840 = vld [vmem:[%s808 + $0x7c] sm:$0xf]
  %s841 = scalar_lea.vmem %s2, 3
  %v842 = vld [vmem:[%s841] sm:$0x1]
  %v844 = vlaneseq
  %v845 = vshrl.u32 %v844, 7
  %v846 = vsub.s32 0, %v845
  %v847 = vrot.slane %v842, %v846
  %v852 = vunpack.c.l.s4 1983009808
  %v853 = vunpack.c.0.s8 %v852
  %v854 = vlaneseq
  %v855 = vshrl.u32 %v854, 7
  %v856 = vsub.s32 %v853, %v855
  %v857 = vrot.slane %v806, %v856
  %v858 = vcombine.high %v857, %v857
  %v860 = vunpack.c.l.s4 1983009808
  %v861 = vunpack.c.0.s8 %v860
  %v862 = vlaneseq
  %v863 = vshrl.u32 %v862, 7
  %v864 = vsub.s32 %v861, %v863
  %v865 = vrot.slane %v807, %v864
  %v866 = vcombine.high %v865, %v865
  %v867 = vunpack.c.l.b16 %v857
  %v868 = vunpack.c.l.b16 %v858
  %v869 = vunpack.c.l.b16 %v865
  %v870 = vunpack.c.l.b16 %v866
  %v871 = vrot.slane %v867, 3
  %v872 = vrot.slane %v869, 2
  %v873 = vsel %vm98, %v872, %v871
  %v874 = vrot.slane %v868, 3
  %v875 = vrot.slane %v870, 2
  %v876 = vsel %vm98, %v875, %v874
  %v877 = vpack.c.b16 %v873, %v873
  %v878 = vpack.c.b16 %v876, %v876
  %v913 = vunpack.c.l.b16 %v809
  %v914 = vunpack.c.l.b16 %v810
  %v915 = vunpack.c.l.b16 %v811
  %v916 = vunpack.c.l.b16 %v812
  %v917 = vunpack.c.l.b16 %v813
  %v918 = vunpack.c.l.b16 %v814
  %v919 = vunpack.c.l.b16 %v815
  %v920 = vunpack.c.l.b16 %v816
  %v921 = vunpack.c.l.b16 %v817
  %v922 = vunpack.c.l.b16 %v818
  %v923 = vunpack.c.l.b16 %v819
  %v924 = vunpack.c.l.b16 %v820
  %v925 = vunpack.c.l.b16 %v821
  %v926 = vunpack.c.l.b16 %v822
  %v927 = vunpack.c.l.b16 %v823
  %v928 = vunpack.c.l.b16 %v824
  %v929 = vunpack.c.l.b16 %v825
  %v930 = vunpack.c.l.b16 %v826
  %v931 = vunpack.c.l.b16 %v827
  %v932 = vunpack.c.l.b16 %v828
  %v933 = vunpack.c.l.b16 %v829
  %v934 = vunpack.c.l.b16 %v830
  %v935 = vunpack.c.l.b16 %v831
  %v936 = vunpack.c.l.b16 %v832
  %v937 = vunpack.c.l.b16 %v833
  %v938 = vunpack.c.l.b16 %v834
  %v939 = vunpack.c.l.b16 %v835
  %v940 = vunpack.c.l.b16 %v836
  %v941 = vunpack.c.l.b16 %v837
  %v942 = vunpack.c.l.b16 %v838
  %v943 = vunpack.c.l.b16 %v839
  %v944 = vunpack.c.l.b16 %v840
  %v945 = vpack.c.b16 %v914, %v913
  %v946 = vpack.c.b16 %v916, %v915
  %v947 = vpack.c.b16 %v918, %v917
  %v948 = vpack.c.b16 %v920, %v919
  %v949 = vpack.c.b16 %v922, %v921
  %v950 = vpack.c.b16 %v924, %v923
  %v951 = vpack.c.b16 %v926, %v925
  %v952 = vpack.c.b16 %v928, %v927
  %v953 = vpack.c.b16 %v930, %v929
  %v954 = vpack.c.b16 %v932, %v931
  %v955 = vpack.c.b16 %v934, %v933
  %v956 = vpack.c.b16 %v936, %v935
  %v957 = vpack.c.b16 %v938, %v937
  %v958 = vpack.c.b16 %v940, %v939
  %v959 = vpack.c.b16 %v942, %v941
  %v960 = vpack.c.b16 %v944, %v943
  %977 = vmatprep.subr.bf16.mxu0 0
  %978 = vmatpush1.bf16.msra.mxu0 %v945
  %979 = vmatprep.subr.bf16.mxu0 0
  %980 = vmatpush1.bf16.msra.mxu0 %v946
  %981 = vmatprep.subr.bf16.mxu0 0
  %982 = vmatpush1.bf16.msra.mxu0 %v947
  %983 = vmatprep.subr.bf16.mxu0 0
  %984 = vmatpush1.bf16.msra.mxu0 %v948
  %985 = vmatprep.subr.bf16.mxu0 0
  %986 = vmatpush1.bf16.msra.mxu0 %v949
  %987 = vmatprep.subr.bf16.mxu0 0
  %988 = vmatpush1.bf16.msra.mxu0 %v950
  %989 = vmatprep.subr.bf16.mxu0 0
  %990 = vmatpush1.bf16.msra.mxu0 %v951
  %991 = vmatprep.subr.bf16.mxu0 0
  %992 = vmatpush1.bf16.msra.mxu0 %v952
  %993 = vmatprep.subr.bf16.mxu0 0
  %994 = vmatpush1.bf16.msra.mxu0 %v953
  %995 = vmatprep.subr.bf16.mxu0 0
  %996 = vmatpush1.bf16.msra.mxu0 %v954
  %997 = vmatprep.subr.bf16.mxu0 0
  %998 = vmatpush1.bf16.msra.mxu0 %v955
  %999 = vmatprep.subr.bf16.mxu0 0
  %1000 = vmatpush1.bf16.msra.mxu0 %v956
  %1001 = vmatprep.subr.bf16.mxu0 0
  %1002 = vmatpush1.bf16.msra.mxu0 %v957
  %1003 = vmatprep.subr.bf16.mxu0 0
  %1004 = vmatpush1.bf16.msra.mxu0 %v958
  %1005 = vmatprep.subr.bf16.mxu0 0
  %1006 = vmatpush1.bf16.msra.mxu0 %v959
  %1007 = vmatprep.subr.bf16.mxu0 0
  %1008 = vmatpush1.bf16.msra.mxu0 %v960
  %1009 = vmatprep.mubr.bf16.mxu0 %v878
  %1010 = vmatmul.mubr.bf16.gmra.mrb[0].mxu0 %v877
  %v1011 = vpop.f32.mrb[0].mxu0
  %v1012 = vadd.f32 %v847, %v1011
  %v1013 = vpop.f32.mrb[0].mxu0
  %v1014 = vpop.f32.mrb[0].mxu0
  %v1015 = vpop.f32.mrb[0].mxu0
  %1016 = vdwg.mxu0
  %v1017 = vld [vmem:[#allocation2] sm:$0xff]
  %v1018 = vld [vmem:[#allocation2 + $0x8] sm:$0xff]
  %v1021 = vunpack.c.l.s4 1966171168
  %v1022 = vunpack.c.0.s8 %v1021
  %v1023 = vlaneseq
  %v1024 = vshrl.u32 %v1023, 7
  %v1025 = vsub.s32 %v1022, %v1024
  %v1026 = vrot.slane %v1012, %v1025
  %v1027 = vcombine.high %v1026, %v1026
  %v1029 = vunpack.c.l.s4 1966171168
  %v1030 = vunpack.c.0.s8 %v1029
  %v1031 = vlaneseq
  %v1032 = vshrl.u32 %v1031, 7
  %v1033 = vsub.s32 %v1030, %v1032
  %v1034 = vrot.slane %v1026, %v1033
  %v1036 = vunpack.c.l.s4 1966171168
  %v1037 = vunpack.c.0.s8 %v1036
  %v1038 = vlaneseq
  %v1039 = vshrl.u32 %v1038, 7
  %v1040 = vsub.s32 %v1037, %v1039
  %v1041 = vrot.slane %v1027, %v1040
  %s1042 = scalar_lea.vmem %s3, 24
  %v1043 = vld [vmem:[%s1042] sm:$0xff]
  %v1044 = vlaneseq
  %v1045 = vshrl.u32 %v1044, 7
  %v1046 = vsub.s32 0, %v1045
  %v1047 = vrot.slane %v1034, %v1046
  %v1048 = vlaneseq
  %v1049 = vshrl.u32 %v1048, 7
  %v1050 = vsub.s32 0, %v1049
  %v1051 = vrot.slane %v1041, %v1050
  %1055 = vset.pattern.permute.xlu0 0
  %1056 = vperm.xlu0 %1055, %v1043
  %v1057 = vpop.permute.xlu0 %1056
  %v1059 = vmul.f32 %v1047, %v1057
  %v1060 = vmul.f32 %v1051, %v1057
  %v1061 = vadd.f32 %v1017, %v1059
  %v1062 = vadd.f32 %v1018, %v1060
  %1063 = vst.msk [vmem:[#allocation2] sm:$0xff] %vm287, %v1061
  %1064 = vst.msk [vmem:[#allocation2 + $0x8] sm:$0xff] %vm287, %v1062
  // Predicated region
  $region26: #{linear_conv2d.1} parent=0 // pred_check
    %p1065 = pneg %p21
  $region27: #{linear_conv2d.1} parent=0 // pred_check_branch
    %1067 = sbr.rel (%p1065) target = $region29
  $region28: #{linear_conv2d.1} parent=0 // pred_region
    %v1068 = vld [vmem:[#allocation2] sm:$0xff]
    %v1069 = vld [vmem:[#allocation2 + $0x8] sm:$0xff]
    %1070 = vst.msk [vmem:[%s5] sm:$0xff] %vm287, %v1068
    %1071 = vst.msk [vmem:[%s5 + $0x8] sm:$0xff] %vm287, %v1069
  $region29: #{linear_conv2d.1} parent=0 // pred_fallthru
    _
  // Predicated region
  $region30: #{linear_conv2d.1} parent=0 // pred_check
    _
  $region31: #{linear_conv2d.1} parent=0 // pred_check_branch
    %1073 = sbr.rel (0) target = $region33
  $region32: #{linear_conv2d.1} parent=0 // pred_region
    _
  $region33: #{linear_conv2d.1} parent=0 // pred_fallthru
    _
  // Predicated region
  $region34: #{linear_conv2d.1} parent=0 // pred_check
    _
  $region35: #{linear_conv2d.1} parent=0 // pred_check_branch
    %1075 = sbr.rel (0) target = $region37
  $region36: #{linear_conv2d.1} parent=0 // pred_region
    _
  $region37: #{linear_conv2d.1} parent=0 // pred_fallthru
    _

</llo_original>
